<compile_context>
chip_gen: v5e
topology: v5e:2x2
jax: 0.10.0
libtpu: 0.0.40
codegen_flags: <defaults>
</compile_context>

<pallas_src>
import jax
import jax.numpy as jnp
from jax.experimental import pallas as pl
from jax.experimental.pallas import tpu as pltpu

EPS = 1e-5          # nn.BatchNorm1d default eps
NEG_SLOPE = 0.01    # nn.LeakyReLU default negative_slope


def _critic_kernel(state_ref, action_ref,
                   w1s_ref, w1a_ref, g1_ref, be1_ref,
                   w2_ref, g2_ref, be2_ref,
                   w3_ref, g3_ref, be3_ref,
                   w4_ref, b4_ref,
                   o_ref):
    """Whole forward pass in one kernel; all operands fit in VMEM."""
    B = state_ref.shape[0]
    inv_b = jnp.float32(1.0 / B)

    def bn_lrelu(h, g_ref, be_ref):
        # Fused training-mode BatchNorm1d (batch mean, biased variance) +
        # LeakyReLU.  One reduction pass + one FMA pass over h.
        s = jnp.sum(h, axis=0, keepdims=True)
        ss = jnp.sum(h * h, axis=0, keepdims=True)
        mean = s * inv_b
        var = ss * inv_b - mean * mean
        scale = g_ref[...] * jax.lax.rsqrt(var + EPS)   # rsqrt -> EUP slot
        shift = be_ref[...] - mean * scale
        y = h * scale + shift
        # LeakyReLU via mul+max (one fewer VALU op than cmp+select).
        return jnp.maximum(y, NEG_SLOPE * y)

    # Layer 1: split-weight matmul avoids materializing concat([state, action]).
    # Biases b1/b2/b3 are omitted: any per-feature constant added before a
    # training-mode BN is cancelled by the mean subtraction.
    h = (jnp.dot(state_ref[...], w1s_ref[...], preferred_element_type=jnp.float32)
         + jnp.dot(action_ref[...], w1a_ref[...], preferred_element_type=jnp.float32))
    h = bn_lrelu(h, g1_ref, be1_ref)

    h = jnp.dot(h, w2_ref[...], preferred_element_type=jnp.float32)
    h = bn_lrelu(h, g2_ref, be2_ref)

    h = jnp.dot(h, w3_ref[...], preferred_element_type=jnp.float32)
    h = bn_lrelu(h, g3_ref, be3_ref)

    o_ref[...] = (jnp.dot(h, w4_ref[...], preferred_element_type=jnp.float32)
                  + b4_ref[...])


def critic_forward(state, action, params):
    """Wrapper: split W1 by input source (no concat) and invoke the kernel."""
    state = state.astype(jnp.float32)
    action = action.astype(jnp.float32)
    B, S = state.shape
    A = action.shape[1]
    H = params["w2"].shape[0]

    w1s = params["w1"][:S, :]    # (S, H)
    w1a = params["w1"][S:, :]    # (A, H)

    args = (state, action,
            w1s, w1a, params["g1"], params["be1"],
            params["w2"], params["g2"], params["be2"],
            params["w3"], params["g3"], params["be3"],
            params["w4"], params["b4"])

    vmem_spec = pl.BlockSpec(memory_space=pltpu.MemorySpace.VMEM)

    # Advisory cost hint for the XLA scheduler.
    matmul_flops = 2 * B * ((S + A) * H + H * H + H * H + H * 1)
    elementwise_flops = 3 * 8 * B * H               # fused BN + LeakyReLU passes
    bytes_accessed = sum(int(a.size) * 4 for a in args) + B * 1 * 4
    cost = pl.CostEstimate(flops=matmul_flops + elementwise_flops,
                           transcendentals=3 * H,   # rsqrt per BN feature
                           bytes_accessed=bytes_accessed)

    return pl.pallas_call(
        _critic_kernel,
        out_shape=jax.ShapeDtypeStruct((B, 1), jnp.float32),
        in_specs=[vmem_spec] * len(args),
        out_specs=vmem_spec,
        cost_estimate=cost,
    )(*args)


def init_params(key, state_size, action_size, hidden_size):
    """Deterministic init mimicking PyTorch Linear's U(-1/sqrt(fan_in), +1/sqrt(fan_in))."""
    def linear(k, fan_in, fan_out):
        kw, kb = jax.random.split(k)
        bound = 1.0 / jnp.sqrt(fan_in)
        w = jax.random.uniform(kw, (fan_in, fan_out), jnp.float32, -bound, bound)
        b = jax.random.uniform(kb, (1, fan_out), jnp.float32, -bound, bound)
        return w, b

    k1, k2, k3, k4 = jax.random.split(key, 4)
    in_dim = state_size + action_size
    w1, b1 = linear(k1, in_dim, hidden_size)
    w2, b2 = linear(k2, hidden_size, hidden_size)
    w3, b3 = linear(k3, hidden_size, hidden_size)
    w4, b4 = linear(k4, hidden_size, 1)

    ones = jnp.ones((1, hidden_size), jnp.float32)
    zeros = jnp.zeros((1, hidden_size), jnp.float32)

    return dict(
        w1=w1, b1=b1, g1=ones, be1=zeros,
        w2=w2, b2=b2, g2=ones, be2=zeros,
        w3=w3, b3=b3, g3=ones, be3=zeros,
        w4=w4, b4=b4,
    )


def _reference(state, action, p):
    """Pure-JAX reference matching the PyTorch module exactly (incl. b1..b3)."""
    x = jnp.concatenate([state, action], axis=1)

    def bn(h, g, b):
        m = jnp.mean(h, axis=0, keepdims=True)
        v = jnp.mean((h - m) ** 2, axis=0, keepdims=True)
        return (h - m) / jnp.sqrt(v + EPS) * g + b

    def lrelu(h):
        return jnp.where(h >= 0, h, NEG_SLOPE * h)

    h = lrelu(bn(x @ p["w1"] + p["b1"], p["g1"], p["be1"]))
    h = lrelu(bn(h @ p["w2"] + p["b2"], p["g2"], p["be2"]))
    h = lrelu(bn(h @ p["w3"] + p["b3"], p["g3"], p["be3"]))
    return h @ p["w4"] + p["b4"]


if __name__ == "__main__":
    STATE, ACTION, HIDDEN, BATCH = 16, 8, 32, 8

    key = jax.random.PRNGKey(0)
    k_s, k_a, k_p = jax.random.split(key, 3)

    state = jax.random.normal(k_s, (BATCH, STATE), jnp.float32)
    action = jax.random.normal(k_a, (BATCH, ACTION), jnp.float32)
    params = init_params(k_p, STATE, ACTION, HIDDEN)

    out = critic_forward(state, action, params)
    out = jax.block_until_ready(out)

    ref = _reference(state, action, params)
    assert out.shape == (BATCH, 1)
    assert jnp.allclose(out, ref, atol=1e-4, rtol=1e-4)

    print("KERNEL_OK")
</pallas_src>

<mosaic_0001>
module attributes {stable_mosaic.version = 11 : i64} {
  func.func @_critic_kernel(%arg0: memref<8x16xf32, #tpu.memory_space<vmem>>, %arg1: memref<8x8xf32, #tpu.memory_space<vmem>>, %arg2: memref<16x32xf32, #tpu.memory_space<vmem>>, %arg3: memref<8x32xf32, #tpu.memory_space<vmem>>, %arg4: memref<1x32xf32, #tpu.memory_space<vmem>>, %arg5: memref<1x32xf32, #tpu.memory_space<vmem>>, %arg6: memref<32x32xf32, #tpu.memory_space<vmem>>, %arg7: memref<1x32xf32, #tpu.memory_space<vmem>>, %arg8: memref<1x32xf32, #tpu.memory_space<vmem>>, %arg9: memref<32x32xf32, #tpu.memory_space<vmem>>, %arg10: memref<1x32xf32, #tpu.memory_space<vmem>>, %arg11: memref<1x32xf32, #tpu.memory_space<vmem>>, %arg12: memref<32x1xf32, #tpu.memory_space<vmem>>, %arg13: memref<1x1xf32, #tpu.memory_space<vmem>>, %arg14: memref<8x1xf32, #tpu.memory_space<vmem>>) attributes {dimension_semantics = [], scalar_prefetch = 0 : i64, scratch_operands = 0 : i64, tpu.core_type = #tpu.core_type<tc>} {
    %c0 = arith.constant 0 : index
    %c0_0 = arith.constant 0 : index
    %0 = vector.load %arg0[%c0, %c0_0] : memref<8x16xf32, #tpu.memory_space<vmem>>, vector<8x16xf32>
    %c0_1 = arith.constant 0 : index
    %c0_2 = arith.constant 0 : index
    %1 = vector.load %arg2[%c0_1, %c0_2] : memref<16x32xf32, #tpu.memory_space<vmem>>, vector<16x32xf32>
    %cst = arith.constant dense<0.000000e+00> : vector<8x32xf32>
    %2 = tpu.matmul %0, %1, %cst {dimension_numbers = #tpu.dot_dimension_numbers<[1], [0], [0], [1], [0, 0, 1, 1], [], []>} : vector<8x16xf32>, vector<16x32xf32>, vector<8x32xf32> -> vector<8x32xf32>
    %c0_3 = arith.constant 0 : index
    %c0_4 = arith.constant 0 : index
    %3 = vector.load %arg1[%c0_3, %c0_4] : memref<8x8xf32, #tpu.memory_space<vmem>>, vector<8x8xf32>
    %c0_5 = arith.constant 0 : index
    %c0_6 = arith.constant 0 : index
    %4 = vector.load %arg3[%c0_5, %c0_6] : memref<8x32xf32, #tpu.memory_space<vmem>>, vector<8x32xf32>
    %cst_7 = arith.constant dense<0.000000e+00> : vector<8x32xf32>
    %5 = tpu.matmul %3, %4, %cst_7 {dimension_numbers = #tpu.dot_dimension_numbers<[1], [0], [0], [1], [0, 0, 1, 1], [], []>} : vector<8x8xf32>, vector<8x32xf32>, vector<8x32xf32> -> vector<8x32xf32>
    %6 = arith.addf %2, %5 : vector<8x32xf32>
    %cst_8 = arith.constant dense<0.000000e+00> : vector<32xf32>
    %7 = vector.multi_reduction <add>, %6, %cst_8 [0] : vector<8x32xf32> to vector<32xf32>
    %8 = vector.shape_cast %7 : vector<32xf32> to vector<1x32xf32>
    %9 = arith.mulf %6, %6 : vector<8x32xf32>
    %cst_9 = arith.constant dense<0.000000e+00> : vector<32xf32>
    %10 = vector.multi_reduction <add>, %9, %cst_9 [0] : vector<8x32xf32> to vector<32xf32>
    %11 = vector.shape_cast %10 : vector<32xf32> to vector<1x32xf32>
    %cst_10 = arith.constant 1.250000e-01 : f32
    %12 = vector.broadcast %cst_10 : f32 to vector<1x32xf32>
    %13 = arith.mulf %8, %12 : vector<1x32xf32>
    %cst_11 = arith.constant 1.250000e-01 : f32
    %14 = vector.broadcast %cst_11 : f32 to vector<1x32xf32>
    %15 = arith.mulf %11, %14 : vector<1x32xf32>
    %16 = arith.mulf %13, %13 : vector<1x32xf32>
    %17 = arith.subf %15, %16 : vector<1x32xf32>
    %c0_12 = arith.constant 0 : index
    %c0_13 = arith.constant 0 : index
    %18 = vector.load %arg4[%c0_12, %c0_13] : memref<1x32xf32, #tpu.memory_space<vmem>>, vector<1x32xf32>
    %cst_14 = arith.constant 9.99999974E-6 : f32
    %19 = vector.broadcast %cst_14 : f32 to vector<1x32xf32>
    %20 = arith.addf %17, %19 : vector<1x32xf32>
    %21 = math.rsqrt %20 : vector<1x32xf32>
    %22 = arith.mulf %18, %21 : vector<1x32xf32>
    %c0_15 = arith.constant 0 : index
    %c0_16 = arith.constant 0 : index
    %23 = vector.load %arg5[%c0_15, %c0_16] : memref<1x32xf32, #tpu.memory_space<vmem>>, vector<1x32xf32>
    %24 = arith.mulf %13, %22 : vector<1x32xf32>
    %25 = arith.subf %23, %24 : vector<1x32xf32>
    %26 = vector.broadcast %22 : vector<1x32xf32> to vector<8x32xf32>
    %27 = arith.mulf %6, %26 : vector<8x32xf32>
    %28 = vector.broadcast %25 : vector<1x32xf32> to vector<8x32xf32>
    %29 = arith.addf %27, %28 : vector<8x32xf32>
    %cst_17 = arith.constant 0.00999999977 : f32
    %30 = vector.broadcast %cst_17 : f32 to vector<8x32xf32>
    %31 = arith.mulf %30, %29 : vector<8x32xf32>
    %32 = arith.maximumf %29, %31 : vector<8x32xf32>
    %c0_18 = arith.constant 0 : index
    %c0_19 = arith.constant 0 : index
    %33 = vector.load %arg6[%c0_18, %c0_19] : memref<32x32xf32, #tpu.memory_space<vmem>>, vector<32x32xf32>
    %cst_20 = arith.constant dense<0.000000e+00> : vector<8x32xf32>
    %34 = tpu.matmul %32, %33, %cst_20 {dimension_numbers = #tpu.dot_dimension_numbers<[1], [0], [0], [1], [0, 0, 1, 1], [], []>} : vector<8x32xf32>, vector<32x32xf32>, vector<8x32xf32> -> vector<8x32xf32>
    %cst_21 = arith.constant dense<0.000000e+00> : vector<32xf32>
    %35 = vector.multi_reduction <add>, %34, %cst_21 [0] : vector<8x32xf32> to vector<32xf32>
    %36 = vector.shape_cast %35 : vector<32xf32> to vector<1x32xf32>
    %37 = arith.mulf %34, %34 : vector<8x32xf32>
    %cst_22 = arith.constant dense<0.000000e+00> : vector<32xf32>
    %38 = vector.multi_reduction <add>, %37, %cst_22 [0] : vector<8x32xf32> to vector<32xf32>
    %39 = vector.shape_cast %38 : vector<32xf32> to vector<1x32xf32>
    %cst_23 = arith.constant 1.250000e-01 : f32
    %40 = vector.broadcast %cst_23 : f32 to vector<1x32xf32>
    %41 = arith.mulf %36, %40 : vector<1x32xf32>
    %cst_24 = arith.constant 1.250000e-01 : f32
    %42 = vector.broadcast %cst_24 : f32 to vector<1x32xf32>
    %43 = arith.mulf %39, %42 : vector<1x32xf32>
    %44 = arith.mulf %41, %41 : vector<1x32xf32>
    %45 = arith.subf %43, %44 : vector<1x32xf32>
    %c0_25 = arith.constant 0 : index
    %c0_26 = arith.constant 0 : index
    %46 = vector.load %arg7[%c0_25, %c0_26] : memref<1x32xf32, #tpu.memory_space<vmem>>, vector<1x32xf32>
    %cst_27 = arith.constant 9.99999974E-6 : f32
    %47 = vector.broadcast %cst_27 : f32 to vector<1x32xf32>
    %48 = arith.addf %45, %47 : vector<1x32xf32>
    %49 = math.rsqrt %48 : vector<1x32xf32>
    %50 = arith.mulf %46, %49 : vector<1x32xf32>
    %c0_28 = arith.constant 0 : index
    %c0_29 = arith.constant 0 : index
    %51 = vector.load %arg8[%c0_28, %c0_29] : memref<1x32xf32, #tpu.memory_space<vmem>>, vector<1x32xf32>
    %52 = arith.mulf %41, %50 : vector<1x32xf32>
    %53 = arith.subf %51, %52 : vector<1x32xf32>
    %54 = vector.broadcast %50 : vector<1x32xf32> to vector<8x32xf32>
    %55 = arith.mulf %34, %54 : vector<8x32xf32>
    %56 = vector.broadcast %53 : vector<1x32xf32> to vector<8x32xf32>
    %57 = arith.addf %55, %56 : vector<8x32xf32>
    %cst_30 = arith.constant 0.00999999977 : f32
    %58 = vector.broadcast %cst_30 : f32 to vector<8x32xf32>
    %59 = arith.mulf %58, %57 : vector<8x32xf32>
    %60 = arith.maximumf %57, %59 : vector<8x32xf32>
    %c0_31 = arith.constant 0 : index
    %c0_32 = arith.constant 0 : index
    %61 = vector.load %arg9[%c0_31, %c0_32] : memref<32x32xf32, #tpu.memory_space<vmem>>, vector<32x32xf32>
    %cst_33 = arith.constant dense<0.000000e+00> : vector<8x32xf32>
    %62 = tpu.matmul %60, %61, %cst_33 {dimension_numbers = #tpu.dot_dimension_numbers<[1], [0], [0], [1], [0, 0, 1, 1], [], []>} : vector<8x32xf32>, vector<32x32xf32>, vector<8x32xf32> -> vector<8x32xf32>
    %cst_34 = arith.constant dense<0.000000e+00> : vector<32xf32>
    %63 = vector.multi_reduction <add>, %62, %cst_34 [0] : vector<8x32xf32> to vector<32xf32>
    %64 = vector.shape_cast %63 : vector<32xf32> to vector<1x32xf32>
    %65 = arith.mulf %62, %62 : vector<8x32xf32>
    %cst_35 = arith.constant dense<0.000000e+00> : vector<32xf32>
    %66 = vector.multi_reduction <add>, %65, %cst_35 [0] : vector<8x32xf32> to vector<32xf32>
    %67 = vector.shape_cast %66 : vector<32xf32> to vector<1x32xf32>
    %cst_36 = arith.constant 1.250000e-01 : f32
    %68 = vector.broadcast %cst_36 : f32 to vector<1x32xf32>
    %69 = arith.mulf %64, %68 : vector<1x32xf32>
    %cst_37 = arith.constant 1.250000e-01 : f32
    %70 = vector.broadcast %cst_37 : f32 to vector<1x32xf32>
    %71 = arith.mulf %67, %70 : vector<1x32xf32>
    %72 = arith.mulf %69, %69 : vector<1x32xf32>
    %73 = arith.subf %71, %72 : vector<1x32xf32>
    %c0_38 = arith.constant 0 : index
    %c0_39 = arith.constant 0 : index
    %74 = vector.load %arg10[%c0_38, %c0_39] : memref<1x32xf32, #tpu.memory_space<vmem>>, vector<1x32xf32>
    %cst_40 = arith.constant 9.99999974E-6 : f32
    %75 = vector.broadcast %cst_40 : f32 to vector<1x32xf32>
    %76 = arith.addf %73, %75 : vector<1x32xf32>
    %77 = math.rsqrt %76 : vector<1x32xf32>
    %78 = arith.mulf %74, %77 : vector<1x32xf32>
    %c0_41 = arith.constant 0 : index
    %c0_42 = arith.constant 0 : index
    %79 = vector.load %arg11[%c0_41, %c0_42] : memref<1x32xf32, #tpu.memory_space<vmem>>, vector<1x32xf32>
    %80 = arith.mulf %69, %78 : vector<1x32xf32>
    %81 = arith.subf %79, %80 : vector<1x32xf32>
    %82 = vector.broadcast %78 : vector<1x32xf32> to vector<8x32xf32>
    %83 = arith.mulf %62, %82 : vector<8x32xf32>
    %84 = vector.broadcast %81 : vector<1x32xf32> to vector<8x32xf32>
    %85 = arith.addf %83, %84 : vector<8x32xf32>
    %cst_43 = arith.constant 0.00999999977 : f32
    %86 = vector.broadcast %cst_43 : f32 to vector<8x32xf32>
    %87 = arith.mulf %86, %85 : vector<8x32xf32>
    %88 = arith.maximumf %85, %87 : vector<8x32xf32>
    %c0_44 = arith.constant 0 : index
    %c0_45 = arith.constant 0 : index
    %89 = vector.load %arg12[%c0_44, %c0_45] : memref<32x1xf32, #tpu.memory_space<vmem>>, vector<32x1xf32>
    %cst_46 = arith.constant dense<0.000000e+00> : vector<8x1xf32>
    %90 = tpu.matmul %88, %89, %cst_46 {dimension_numbers = #tpu.dot_dimension_numbers<[1], [0], [0], [1], [0, 0, 1, 1], [], []>} : vector<8x32xf32>, vector<32x1xf32>, vector<8x1xf32> -> vector<8x1xf32>
    %c0_47 = arith.constant 0 : index
    %c0_48 = arith.constant 0 : index
    %91 = vector.load %arg13[%c0_47, %c0_48] : memref<1x1xf32, #tpu.memory_space<vmem>>, vector<1x1xf32>
    %92 = vector.broadcast %91 : vector<1x1xf32> to vector<8x1xf32>
    %93 = arith.addf %90, %92 : vector<8x1xf32>
    %c0_49 = arith.constant 0 : index
    %c0_50 = arith.constant 0 : index
    %94 = vector.load %arg14[%c0_49, %c0_50] : memref<8x1xf32, #tpu.memory_space<vmem>>, vector<8x1xf32>
    tpu.vector_store %arg14[%c0_49, %c0_50], %93 {strides = array<i32>} : memref<8x1xf32, #tpu.memory_space<vmem>>, vector<8x1xf32>,
    return
  }
}

</mosaic_0001>

<llo_original>
// kernel: tpu_custom_call.1
$region0: #{tpu_custom_call.1}
  #allocation0 [shape = 'u32[]', space=smem, size = 0x4, offset = 0x4, fixed_abs, tag = 'smem constant byte address 0x4 - core index']
  #allocation1 [shape = 'u32[72,128]{1,0:T(1,128)}', space=vmem, size = 0x9000, scoped, tag = 'internal scratch']
  #allocation2 [shape = 'f32[1,1]{1,0:T(1,128)S(1)}', space=vmem, size = 0x200, scoped, tag = 'scoped memory for tpu_custom_call.1']
  %s0 = inlined_call_operand.vmem [shape: f32[8,16], index: 0, kind: input, shape index: {}]
  %s1 = inlined_call_operand.hbm [shape: f32[8,8], index: 1, kind: input, shape index: {}]
  %s2 = inlined_call_operand.hbm [shape: f32[16,32], index: 2, kind: input, shape index: {}]
  %s3 = inlined_call_operand.hbm [shape: f32[8,32], index: 3, kind: input, shape index: {}]
  %s4 = inlined_call_operand.hbm [shape: f32[1,32], index: 4, kind: input, shape index: {}]
  %s5 = inlined_call_operand.hbm [shape: f32[1,32], index: 5, kind: input, shape index: {}]
  %s6 = inlined_call_operand.vmem [shape: f32[32,32], index: 6, kind: input, shape index: {}]
  %s7 = inlined_call_operand.hbm [shape: f32[1,32], index: 7, kind: input, shape index: {}]
  %s8 = inlined_call_operand.vmem [shape: f32[1,32], index: 8, kind: input, shape index: {}]
  %s9 = inlined_call_operand.hbm [shape: f32[32,32], index: 9, kind: input, shape index: {}]
  %s10 = inlined_call_operand.vmem [shape: f32[1,32], index: 10, kind: input, shape index: {}]
  %s11 = inlined_call_operand.vmem [shape: f32[1,32], index: 11, kind: input, shape index: {}]
  %s12 = inlined_call_operand.vmem [shape: f32[32,1], index: 12, kind: input, shape index: {}]
  %s13 = inlined_call_operand.<no memory space> [shape: f32[1,1], index: 13, kind: input, shape index: {}]
  %s14 = inlined_call_operand.vmem [shape: f32[8,1], index: 14, kind: output, shape index: {}]
  %s15 = sld [smem:[#allocation0]]
  $region94: #{tpu_custom_call.1} parent=0
    _
  %s17 = ssub.s32 1, %s15
  %s18 = scalar_select 0, %s17, %s15
  %v19 = vstv %s13
  %20 = vst [vmem:[#allocation2] sm:$0x1] %v19
  $region1: #{tpu_custom_call.1} parent=0
    #allocation3 [shape = 'u8[4096]{0}', space=vmem, size = 0x1000, scoped, tag = 'input window, operand 1, single buffered']
    #allocation4 [shape = 's32[1]{0}', space=sflag, size = 0x4, scoped, tag = 'scoped memory for tpu_custom_call.1']
    #allocation5 [shape = 'u8[8192]{0}', space=vmem, size = 0x2000, scoped, tag = 'input window, operand 2, single buffered']
    #allocation6 [shape = 's32[1]{0}', space=sflag, size = 0x4, scoped, tag = 'scoped memory for tpu_custom_call.1']
    #allocation7 [shape = 'u8[4096]{0}', space=vmem, size = 0x1000, scoped, tag = 'input window, operand 3, single buffered']
    #allocation8 [shape = 'u8[512]{0}', space=vmem, size = 0x400, scoped, tag = 'input window, operand 4, single buffered']
    #allocation9 [shape = 's32[1]{0}', space=sflag, size = 0x4, scoped, tag = 'scoped memory for tpu_custom_call.1']
    #allocation10 [shape = 'u8[512]{0}', space=vmem, size = 0x400, scoped, tag = 'input window, operand 5, single buffered']
    #allocation11 [shape = 'u8[512]{0}', space=vmem, size = 0x400, scoped, tag = 'input window, operand 7, single buffered']
    #allocation12 [shape = 's32[1]{0}', space=sflag, size = 0x4, scoped, tag = 'scoped memory for tpu_custom_call.1']
    #allocation13 [shape = 'u8[16384]{0}', space=vmem, size = 0x4000, scoped, tag = 'input window, operand 9, single buffered']
    %21 = vsyncpa [#allocation4], 0
    %22 = vsyncpa [#allocation6], 0
    %23 = vsyncpa [#allocation9], 0
    %24 = vsyncpa [#allocation12], 0
    // Predicated region
    $region2: #{tpu_custom_call.1} parent=1 // pred_check
      _
    $region3: #{tpu_custom_call.1} parent=1 // pred_check_branch
      %26 = sbr.rel (0) target = $region5
    $region4: #{tpu_custom_call.1} parent=1 // pred_region
      _
    $region5: #{tpu_custom_call.1} parent=1 // pred_fallthru
      _
    // Predicated region
    $region6: #{tpu_custom_call.1} parent=1 // pred_check
      _
    $region7: #{tpu_custom_call.1} parent=1 // pred_check_branch
      %28 = sbr.rel (0) target = $region9
    $region8: #{tpu_custom_call.1} parent=1 // pred_region
      %30 = vsyncadd [#allocation4], 0
      %s32 = sshll.u32 %s1, 4
      %s33 = int_to_ptr.hbm [resolvable:$true] %s32
      %s34 = sshll.u32 [#allocation3], 4
      %s35 = int_to_ptr.vmem [resolvable:$true] %s34
      %37 = dma.hbm_to_vmem [thread:$0]  %s33, 128, %s35, [#allocation4]
    $region9: #{tpu_custom_call.1} parent=1 // pred_fallthru
      _
    // Predicated region
    $region10: #{tpu_custom_call.1} parent=1 // pred_check
      _
    $region11: #{tpu_custom_call.1} parent=1 // pred_check_branch
      %39 = sbr.rel (0) target = $region13
    $region12: #{tpu_custom_call.1} parent=1 // pred_region
      %41 = vsyncadd [#allocation6], 0
      %s42 = sshll.u32 %s2, 4
      %s43 = int_to_ptr.hbm [resolvable:$true] %s42
      %s44 = sshll.u32 [#allocation5], 4
      %s45 = int_to_ptr.vmem [resolvable:$true] %s44
      %50 = dma.hbm_to_vmem [thread:$0]  %s43, 256, %s45, [#allocation6], 128, 128, 8
    $region13: #{tpu_custom_call.1} parent=1 // pred_fallthru
      _
    // Predicated region
    $region14: #{tpu_custom_call.1} parent=1 // pred_check
      _
    $region15: #{tpu_custom_call.1} parent=1 // pred_check_branch
      %52 = sbr.rel (0) target = $region17
    $region16: #{tpu_custom_call.1} parent=1 // pred_region
      %54 = vsyncadd [#allocation6], 0
      %s56 = sshll.u32 %s3, 4
      %s57 = int_to_ptr.hbm [resolvable:$true] %s56
      %s58 = sshll.u32 [#allocation7], 4
      %s59 = int_to_ptr.vmem [resolvable:$true] %s58
      %61 = dma.hbm_to_vmem [thread:$0]  %s57, 128, %s59, [#allocation6]
    $region17: #{tpu_custom_call.1} parent=1 // pred_fallthru
      _
    // Predicated region
    $region18: #{tpu_custom_call.1} parent=1 // pred_check
      _
    $region19: #{tpu_custom_call.1} parent=1 // pred_check_branch
      %63 = sbr.rel (0) target = $region21
    $region20: #{tpu_custom_call.1} parent=1 // pred_region
      %65 = vsyncadd [#allocation9], 0
      %s67 = sshll.u32 %s4, 4
      %s68 = int_to_ptr.hbm [resolvable:$true] %s67
      %s69 = sshll.u32 [#allocation8], 4
      %s70 = int_to_ptr.vmem [resolvable:$true] %s69
      %72 = dma.hbm_to_vmem [thread:$0]  %s68, 16, %s70, [#allocation9]
    $region21: #{tpu_custom_call.1} parent=1 // pred_fallthru
      _
    // Predicated region
    $region22: #{tpu_custom_call.1} parent=1 // pred_check
      _
    $region23: #{tpu_custom_call.1} parent=1 // pred_check_branch
      %74 = sbr.rel (0) target = $region25
    $region24: #{tpu_custom_call.1} parent=1 // pred_region
      %76 = vsyncadd [#allocation9], 0
      %s78 = sshll.u32 %s5, 4
      %s79 = int_to_ptr.hbm [resolvable:$true] %s78
      %s80 = sshll.u32 [#allocation10], 4
      %s81 = int_to_ptr.vmem [resolvable:$true] %s80
      %83 = dma.hbm_to_vmem [thread:$0]  %s79, 16, %s81, [#allocation9]
    $region25: #{tpu_custom_call.1} parent=1 // pred_fallthru
      _
    // Predicated region
    $region26: #{tpu_custom_call.1} parent=1 // pred_check
      _
    $region27: #{tpu_custom_call.1} parent=1 // pred_check_branch
      %85 = sbr.rel (0) target = $region29
    $region28: #{tpu_custom_call.1} parent=1 // pred_region
      _
    $region29: #{tpu_custom_call.1} parent=1 // pred_fallthru
      _
    // Predicated region
    $region30: #{tpu_custom_call.1} parent=1 // pred_check
      _
    $region31: #{tpu_custom_call.1} parent=1 // pred_check_branch
      %87 = sbr.rel (0) target = $region33
    $region32: #{tpu_custom_call.1} parent=1 // pred_region
      %89 = vsyncadd [#allocation12], 0
      %s91 = sshll.u32 %s7, 4
      %s92 = int_to_ptr.hbm [resolvable:$true] %s91
      %s93 = sshll.u32 [#allocation11], 4
      %s94 = int_to_ptr.vmem [resolvable:$true] %s93
      %96 = dma.hbm_to_vmem [thread:$0]  %s92, 16, %s94, [#allocation12]
    $region33: #{tpu_custom_call.1} parent=1 // pred_fallthru
      _
    // Predicated region
    $region34: #{tpu_custom_call.1} parent=1 // pred_check
      _
    $region35: #{tpu_custom_call.1} parent=1 // pred_check_branch
      %98 = sbr.rel (0) target = $region37
    $region36: #{tpu_custom_call.1} parent=1 // pred_region
      _
    $region37: #{tpu_custom_call.1} parent=1 // pred_fallthru
      _
    // Predicated region
    $region38: #{tpu_custom_call.1} parent=1 // pred_check
      _
    $region39: #{tpu_custom_call.1} parent=1 // pred_check_branch
      %100 = sbr.rel (0) target = $region41
    $region40: #{tpu_custom_call.1} parent=1 // pred_region
      %102 = vsyncadd [#allocation12], 0
      %s103 = sshll.u32 %s9, 4
      %s104 = int_to_ptr.hbm [resolvable:$true] %s103
      %s105 = sshll.u32 [#allocation13], 4
      %s106 = int_to_ptr.vmem [resolvable:$true] %s105
      %111 = dma.hbm_to_vmem [thread:$0]  %s104, 512, %s106, [#allocation12], 128, 128, 8
    $region41: #{tpu_custom_call.1} parent=1 // pred_fallthru
      _
    // Predicated region
    $region42: #{tpu_custom_call.1} parent=1 // pred_check
      _
    $region43: #{tpu_custom_call.1} parent=1 // pred_check_branch
      %113 = sbr.rel (0) target = $region45
    $region44: #{tpu_custom_call.1} parent=1 // pred_region
      _
    $region45: #{tpu_custom_call.1} parent=1 // pred_fallthru
      _
    // Predicated region
    $region46: #{tpu_custom_call.1} parent=1 // pred_check
      _
    $region47: #{tpu_custom_call.1} parent=1 // pred_check_branch
      %115 = sbr.rel (0) target = $region49
    $region48: #{tpu_custom_call.1} parent=1 // pred_region
      _
    $region49: #{tpu_custom_call.1} parent=1 // pred_fallthru
      _
    // Predicated region
    $region50: #{tpu_custom_call.1} parent=1 // pred_check
      _
    $region51: #{tpu_custom_call.1} parent=1 // pred_check_branch
      %117 = sbr.rel (0) target = $region53
    $region52: #{tpu_custom_call.1} parent=1 // pred_region
      _
    $region53: #{tpu_custom_call.1} parent=1 // pred_fallthru
      _
    // Predicated region
    $region54: #{tpu_custom_call.1} parent=1 // pred_check
      _
    $region55: #{tpu_custom_call.1} parent=1 // pred_check_branch
      %119 = sbr.rel (0) target = $region57
    $region56: #{tpu_custom_call.1} parent=1 // pred_region
      _
    $region57: #{tpu_custom_call.1} parent=1 // pred_fallthru
      _
    // Predicated region
    $region58: #{tpu_custom_call.1} parent=1 // pred_check
      _
    $region59: #{tpu_custom_call.1} parent=1 // pred_check_branch
      %121 = sbr.rel (0) target = $region61
    $region60: #{tpu_custom_call.1} parent=1 // pred_region
      %123 = dma.done [#allocation4], 128
    $region61: #{tpu_custom_call.1} parent=1 // pred_fallthru
      _
    // Predicated region
    $region62: #{tpu_custom_call.1} parent=1 // pred_check
      _
    $region63: #{tpu_custom_call.1} parent=1 // pred_check_branch
      %125 = sbr.rel (0) target = $region65
    $region64: #{tpu_custom_call.1} parent=1 // pred_region
      %127 = dma.done [#allocation6], 256
    $region65: #{tpu_custom_call.1} parent=1 // pred_fallthru
      _
    // Predicated region
    $region66: #{tpu_custom_call.1} parent=1 // pred_check
      _
    $region67: #{tpu_custom_call.1} parent=1 // pred_check_branch
      %129 = sbr.rel (0) target = $region69
    $region68: #{tpu_custom_call.1} parent=1 // pred_region
      %131 = dma.done [#allocation6], 128
    $region69: #{tpu_custom_call.1} parent=1 // pred_fallthru
      _
    // Predicated region
    $region70: #{tpu_custom_call.1} parent=1 // pred_check
      _
    $region71: #{tpu_custom_call.1} parent=1 // pred_check_branch
      %133 = sbr.rel (0) target = $region73
    $region72: #{tpu_custom_call.1} parent=1 // pred_region
      %135 = dma.done [#allocation9], 16
    $region73: #{tpu_custom_call.1} parent=1 // pred_fallthru
      _
    // Predicated region
    $region74: #{tpu_custom_call.1} parent=1 // pred_check
      _
    $region75: #{tpu_custom_call.1} parent=1 // pred_check_branch
      %137 = sbr.rel (0) target = $region77
    $region76: #{tpu_custom_call.1} parent=1 // pred_region
      %139 = dma.done [#allocation9], 16
    $region77: #{tpu_custom_call.1} parent=1 // pred_fallthru
      _
    // Predicated region
    $region78: #{tpu_custom_call.1} parent=1 // pred_check
      _
    $region79: #{tpu_custom_call.1} parent=1 // pred_check_branch
      %141 = sbr.rel (0) target = $region81
    $region80: #{tpu_custom_call.1} parent=1 // pred_region
      %143 = dma.done [#allocation12], 16
    $region81: #{tpu_custom_call.1} parent=1 // pred_fallthru
      _
    // Predicated region
    $region82: #{tpu_custom_call.1} parent=1 // pred_check
      _
    $region83: #{tpu_custom_call.1} parent=1 // pred_check_branch
      %145 = sbr.rel (0) target = $region85
    $region84: #{tpu_custom_call.1} parent=1 // pred_region
      %147 = dma.done [#allocation12], 512
    $region85: #{tpu_custom_call.1} parent=1 // pred_fallthru
      _
    %v148 = vld [vmem:[%s0] sm:$0xff]
    %v149 = vld [vmem:[#allocation5] sm:$0xff]
    %v150 = vld [vmem:[#allocation5 + $0x8] sm:$0xff]
    %v151 = vld [vmem:[#allocation3] sm:$0xff]
    %v152 = vld [vmem:[#allocation7] sm:$0xff]
    %vm153 = vcmask 64512
    %v155 = vsel %vm153, %v151, 0
    %157 = vmatpush.msra.mxu0 0.0
    %158 = vmatpush.msra.mxu0 0.0
    %159 = vmatpush.msra.mxu0 0.0
    %160 = vmatpush.msra.mxu0 0.0
    %161 = vmatpush.msra.mxu0 0.0
    %162 = vmatpush.msra.mxu0 0.0
    %163 = vmatpush.msra.mxu0 0.0
    %164 = vmatpush.msra.mxu0 0.0
    %165 = vmatpush.msra.mxu0 0.0
    %166 = vmatpush.msra.mxu0 0.0
    %167 = vmatpush.msra.mxu0 0.0
    %168 = vmatpush.msra.mxu0 0.0
    %169 = vmatpush.msra.mxu0 0.0
    %170 = vmatpush.msra.mxu0 0.0
    %171 = vmatpush.msra.mxu0 0.0
    %172 = vmatpush.msra.mxu0 %v152
    %173 = vmatmul.f32.gmra.mxu0 %v155
    %v174 = vpop.f32.mrf.mxu0
    %v175 = vadd.f32 0.0, %v174
    %176 = vdwg.mxu0
    %vm177 = vcmask 130048
    %v179 = vsel %vm177, %v148, 0
    %181 = vmatpush.msra.mxu0 0.0
    %182 = vmatpush.msra.mxu0 0.0
    %183 = vmatpush.msra.mxu0 0.0
    %184 = vmatpush.msra.mxu0 0.0
    %185 = vmatpush.msra.mxu0 0.0
    %186 = vmatpush.msra.mxu0 0.0
    %187 = vmatpush.msra.mxu0 0.0
    %188 = vmatpush.msra.mxu0 0.0
    %189 = vmatpush.msra.mxu0 0.0
    %190 = vmatpush.msra.mxu0 0.0
    %191 = vmatpush.msra.mxu0 0.0
    %192 = vmatpush.msra.mxu0 0.0
    %193 = vmatpush.msra.mxu0 0.0
    %194 = vmatpush.msra.mxu0 0.0
    %195 = vmatpush.msra.mxu0 %v150
    %196 = vmatpush.msra.mxu0 %v149
    %197 = vmatmul.f32.gmra.mxu0 %v179
    %v198 = vpop.f32.mrf.mxu0
    %v199 = vadd.f32 %v175, %v198
    %200 = vdwg.mxu0
    %vm201 = vcmask 261120
    %v202 = vsel %vm201, %v199, 0.0
    %v203 = vrot.slane %v202, 4
    %v204 = vadd.f32 %v202, %v203
    %v205 = vrot.slane %v204, 2
    %v206 = vadd.f32 %v204, %v205
    %v207 = vrot.slane %v206, 1
    %v208 = vadd.f32 %v206, %v207
    %v209 = vmul.f32 %v199, %v199
    %v210 = vsel %vm201, %v209, 0.0
    %v211 = vrot.slane %v210, 4
    %v212 = vadd.f32 %v210, %v211
    %v213 = vrot.slane %v212, 2
    %v214 = vadd.f32 %v212, %v213
    %v215 = vrot.slane %v214, 1
    %v216 = vadd.f32 %v214, %v215
    %v217 = vmul.f32 %v208, 0.125
    %v218 = vmul.f32 %v216, 0.125
    %v219 = vmul.f32 %v217, %v217
    %v220 = vsub.f32 %v218, %v219
    %v221 = vld [vmem:[#allocation8] sm:$0x1]
    %v222 = vadd.f32 %v220, 1e-05
    %v223 = vrsqrt.pop %v222
    %v224 = vmul.f32 %v223, %v222
    %v225 = vmul.f32 %v224, %v223
    %v226 = vmul.f32 0.5, %v225
    %v227 = vsub.f32 1.5, %v226
    %v228 = vmul.f32 %v223, %v227
    %vm229 = vweird.f32 %v222
    %vm230 = vweird.f32 %v223
    %vm231 = vmor %vm229, %vm230
    %v232 = vsel %vm231, %v223, %v228
    %v233 = vmul.f32 %v221, %v232
    %v234 = vld [vmem:[#allocation10] sm:$0x1]
    %v235 = vmul.f32 %v217, %v233
    %v236 = vsub.f32 %v234, %v235
    %v238 = vperm.slane %v233, 0
    %v240 = vmul.f32 %v199, %v238
    %v242 = vperm.slane %v236, 0
    %v244 = vadd.f32 %v240, %v242
    %v245 = vmul.f32 %v244, 0.01
    %v246 = vmax.f32 %v244, %v245
    %v247 = vld [vmem:[%s6] sm:$0xff]
    %v248 = vld [vmem:[%s6 + $0x8] sm:$0xff]
    %v249 = vld [vmem:[%s6 + $0x10] sm:$0xff]
    %v250 = vld [vmem:[%s6 + $0x18] sm:$0xff]
    %v252 = vsel %vm201, %v246, 0
    %254 = vmatpush.msra.mxu0 0.0
    %255 = vmatpush.msra.mxu0 0.0
    %256 = vmatpush.msra.mxu0 0.0
    %257 = vmatpush.msra.mxu0 0.0
    %258 = vmatpush.msra.mxu0 0.0
    %259 = vmatpush.msra.mxu0 0.0
    %260 = vmatpush.msra.mxu0 0.0
    %261 = vmatpush.msra.mxu0 0.0
    %262 = vmatpush.msra.mxu0 0.0
    %263 = vmatpush.msra.mxu0 0.0
    %264 = vmatpush.msra.mxu0 0.0
    %265 = vmatpush.msra.mxu0 0.0
    %266 = vmatpush.msra.mxu0 %v250
    %267 = vmatpush.msra.mxu0 %v249
    %268 = vmatpush.msra.mxu0 %v248
    %269 = vmatpush.msra.mxu0 %v247
    %270 = vmatmul.f32.gmra.mxu0 %v252
    %v271 = vpop.f32.mrf.mxu0
    %v272 = vadd.f32 0.0, %v271
    %273 = vdwg.mxu0
    %v274 = vsel %vm201, %v272, 0.0
    %v275 = vrot.slane %v274, 4
    %v276 = vadd.f32 %v274, %v275
    %v277 = vrot.slane %v276, 2
    %v278 = vadd.f32 %v276, %v277
    %v279 = vrot.slane %v278, 1
    %v280 = vadd.f32 %v278, %v279
    %v281 = vmul.f32 %v272, %v272
    %v282 = vsel %vm201, %v281, 0.0
    %v283 = vrot.slane %v282, 4
    %v284 = vadd.f32 %v282, %v283
    %v285 = vrot.slane %v284, 2
    %v286 = vadd.f32 %v284, %v285
    %v287 = vrot.slane %v286, 1
    %v288 = vadd.f32 %v286, %v287
    %v289 = vmul.f32 %v280, 0.125
    %v290 = vmul.f32 %v288, 0.125
    %v291 = vmul.f32 %v289, %v289
    %v292 = vsub.f32 %v290, %v291
    %v293 = vld [vmem:[#allocation11] sm:$0x1]
    %v294 = vadd.f32 %v292, 1e-05
    %v295 = vrsqrt.pop %v294
    %v296 = vmul.f32 %v295, %v294
    %v297 = vmul.f32 %v296, %v295
    %v298 = vmul.f32 0.5, %v297
    %v299 = vsub.f32 1.5, %v298
    %v300 = vmul.f32 %v295, %v299
    %vm301 = vweird.f32 %v294
    %vm302 = vweird.f32 %v295
    %vm303 = vmor %vm301, %vm302
    %v304 = vsel %vm303, %v295, %v300
    %v305 = vmul.f32 %v293, %v304
    %v306 = vld [vmem:[%s8] sm:$0x1]
    %v307 = vmul.f32 %v289, %v305
    %v308 = vsub.f32 %v306, %v307
    %v310 = vperm.slane %v305, 0
    %v312 = vmul.f32 %v272, %v310
    %v314 = vperm.slane %v308, 0
    %v316 = vadd.f32 %v312, %v314
    %v317 = vmul.f32 %v316, 0.01
    %v318 = vmax.f32 %v316, %v317
    %v319 = vld [vmem:[#allocation13] sm:$0xff]
    %v320 = vld [vmem:[#allocation13 + $0x8] sm:$0xff]
    %v321 = vld [vmem:[#allocation13 + $0x10] sm:$0xff]
    %v322 = vld [vmem:[#allocation13 + $0x18] sm:$0xff]
    %v324 = vsel %vm201, %v318, 0
    %326 = vmatpush.msra.mxu0 0.0
    %327 = vmatpush.msra.mxu0 0.0
    %328 = vmatpush.msra.mxu0 0.0
    %329 = vmatpush.msra.mxu0 0.0
    %330 = vmatpush.msra.mxu0 0.0
    %331 = vmatpush.msra.mxu0 0.0
    %332 = vmatpush.msra.mxu0 0.0
    %333 = vmatpush.msra.mxu0 0.0
    %334 = vmatpush.msra.mxu0 0.0
    %335 = vmatpush.msra.mxu0 0.0
    %336 = vmatpush.msra.mxu0 0.0
    %337 = vmatpush.msra.mxu0 0.0
    %338 = vmatpush.msra.mxu0 %v322
    %339 = vmatpush.msra.mxu0 %v321
    %340 = vmatpush.msra.mxu0 %v320
    %341 = vmatpush.msra.mxu0 %v319
    %342 = vmatmul.f32.gmra.mxu0 %v324
    %v343 = vpop.f32.mrf.mxu0
    %v344 = vadd.f32 0.0, %v343
    %345 = vdwg.mxu0
    %v346 = vsel %vm201, %v344, 0.0
    %v347 = vrot.slane %v346, 4
    %v348 = vadd.f32 %v346, %v347
    %v349 = vrot.slane %v348, 2
    %v350 = vadd.f32 %v348, %v349
    %v351 = vrot.slane %v350, 1
    %v352 = vadd.f32 %v350, %v351
    %v353 = vmul.f32 %v344, %v344
    %v354 = vsel %vm201, %v353, 0.0
    %v355 = vrot.slane %v354, 4
    %v356 = vadd.f32 %v354, %v355
    %v357 = vrot.slane %v356, 2
    %v358 = vadd.f32 %v356, %v357
    %v359 = vrot.slane %v358, 1
    %v360 = vadd.f32 %v358, %v359
    %v361 = vmul.f32 %v352, 0.125
    %v362 = vmul.f32 %v360, 0.125
    %v363 = vmul.f32 %v361, %v361
    %v364 = vsub.f32 %v362, %v363
    %v365 = vld [vmem:[%s10] sm:$0x1]
    %v366 = vadd.f32 %v364, 1e-05
    %v367 = vrsqrt.pop %v366
    %v368 = vmul.f32 %v367, %v366
    %v369 = vmul.f32 %v368, %v367
    %v370 = vmul.f32 0.5, %v369
    %v371 = vsub.f32 1.5, %v370
    %v372 = vmul.f32 %v367, %v371
    %vm373 = vweird.f32 %v366
    %vm374 = vweird.f32 %v367
    %vm375 = vmor %vm373, %vm374
    %v376 = vsel %vm375, %v367, %v372
    %v377 = vmul.f32 %v365, %v376
    %v378 = vld [vmem:[%s11] sm:$0x1]
    %v379 = vmul.f32 %v361, %v377
    %v380 = vsub.f32 %v378, %v379
    %v382 = vperm.slane %v377, 0
    %v384 = vmul.f32 %v344, %v382
    %v386 = vperm.slane %v380, 0
    %v388 = vadd.f32 %v384, %v386
    %v389 = vmul.f32 %v388, 0.01
    %v390 = vmax.f32 %v388, %v389
    %v391 = vld [vmem:[%s12] sm:$0xff]
    %v392 = vld [vmem:[%s12 + $0x8] sm:$0xff]
    %v393 = vld [vmem:[%s12 + $0x10] sm:$0xff]
    %v394 = vld [vmem:[%s12 + $0x18] sm:$0xff]
    %v395 = vld [vmem:[#allocation2] sm:$0x1]
    %v397 = vperm.slane %v395, 0
    %v400 = vsel %vm201, %v390, 0
    %402 = vmatpush.msra.mxu0 0.0
    %403 = vmatpush.msra.mxu0 0.0
    %404 = vmatpush.msra.mxu0 0.0
    %405 = vmatpush.msra.mxu0 0.0
    %406 = vmatpush.msra.mxu0 0.0
    %407 = vmatpush.msra.mxu0 0.0
    %408 = vmatpush.msra.mxu0 0.0
    %409 = vmatpush.msra.mxu0 0.0
    %410 = vmatpush.msra.mxu0 0.0
    %411 = vmatpush.msra.mxu0 0.0
    %412 = vmatpush.msra.mxu0 0.0
    %413 = vmatpush.msra.mxu0 0.0
    %414 = vmatpush.msra.mxu0 %v394
    %415 = vmatpush.msra.mxu0 %v393
    %416 = vmatpush.msra.mxu0 %v392
    %417 = vmatpush.msra.mxu0 %v391
    %418 = vmatmul.f32.gmra.mxu0 %v400
    %v419 = vpop.f32.mrf.mxu0
    %v420 = vadd.f32 %v397, %v419
    %421 = vdwg.mxu0
    %vm422 = vcmask 7168
    %423 = vst.msk [vmem:[%s14] sm:$0xff] %vm422, %v420
    // Predicated region
    $region86: #{tpu_custom_call.1} parent=1 // pred_check
      _
    $region87: #{tpu_custom_call.1} parent=1 // pred_check_branch
      %425 = sbr.rel (0) target = $region89
    $region88: #{tpu_custom_call.1} parent=1 // pred_region
      _
    $region89: #{tpu_custom_call.1} parent=1 // pred_fallthru
      _
    // Predicated region
    $region90: #{tpu_custom_call.1} parent=1 // pred_check
      _
    $region91: #{tpu_custom_call.1} parent=1 // pred_check_branch
      %427 = sbr.rel (0) target = $region93
    $region92: #{tpu_custom_call.1} parent=1 // pred_region
      _
    $region93: #{tpu_custom_call.1} parent=1 // pred_fallthru
      _
    %428 = vsyncpa [#allocation4], 1
    %429 = vsyncpa [#allocation6], 1
    %430 = vsyncpa [#allocation9], 1
    %431 = vsyncpa [#allocation12], 1

</llo_original>
